<compile_context>
chip_gen: v7x
topology: tpu7x:2x2x1
jax: 0.10.0
libtpu: 0.0.40
codegen_flags: <defaults>
</compile_context>

<pallas_src>
import jax
import jax.numpy as jnp
from jax.experimental import pallas as pl
from jax.experimental.pallas import tpu as pltpu


HIDDEN = 64


def _round_up(x, m):
    return ((x + m - 1) // m) * m


def critic_kernel(x_ref, w1_ref, b1_ref, w2_ref, b2_ref, w3_ref, b3_ref, o_ref):
    # Stream f32 state from HBM; cast to bf16 on the VPU (cheap, hidden).
    x = x_ref[...].astype(jnp.bfloat16)                              # [TB, S]
    # fc1 + ReLU: MXU matmul with f32 accumulation; bias/ReLU on VPU in f32.
    h1 = jnp.dot(x, w1_ref[...], preferred_element_type=jnp.float32) + b1_ref[...]
    h1 = jnp.maximum(h1, 0.0)                                        # [TB, 64] f32
    # fc2 + ReLU
    h2 = jnp.dot(h1.astype(jnp.bfloat16), w2_ref[...],
                 preferred_element_type=jnp.float32) + b2_ref[...]
    h2 = jnp.maximum(h2, 0.0)                                        # [TB, 64] f32
    # Value head on the MXU as well ([TB,64] @ [64,1]); keeps the XLU idle and
    # the masked column stores hide under the MXU slot.
    v = jnp.dot(h2.astype(jnp.bfloat16), w3_ref[...],
                preferred_element_type=jnp.float32) + b3_ref[...]
    o_ref[...] = v.astype(o_ref.dtype)                               # [TB, 1]


def critic_forward(state, params, *, block_b=8192):
    """state: [B, state_dims] f32 -> value: [B, 1] f32."""
    w1, b1, w2, b2, w3, b3 = params
    B, S = state.shape
    H = w1.shape[1]

    # ----- batch tile selection -------------------------------------------
    if B <= 8:
        # Single block covering the whole (tiny) batch.  tb may not be a
        # multiple of 8 here; that is legal because it equals the full batch
        # dim of both the input and the output array (do not "fix" this).
        tb = B
    else:
        # Keep the tile a multiple of 8 (sublane), cap it at block_b, and
        # guarantee at least 2 grid steps so the "parallel" batch axis can
        # feed both TensorCores on v7x.
        tb = min(_round_up(block_b, 8), _round_up(pl.cdiv(B, 2), 8))
    grid_b = pl.cdiv(B, tb)
    b_pad = grid_b * tb   # output is over-allocated; extra rows sliced off below

    # ----- operand preparation (weights are tiny + VMEM-resident) ----------
    w1_b = w1.astype(jnp.bfloat16)                  # [S, 64]
    w2_b = w2.astype(jnp.bfloat16)                  # [64, 64]
    w3_b = w3.reshape(H, 1).astype(jnp.bfloat16)    # [64, 1]
    b1_f = b1.reshape(1, H).astype(jnp.float32)
    b2_f = b2.reshape(1, H).astype(jnp.float32)
    b3_f = b3.reshape(1, 1).astype(jnp.float32)

    # ----- VMEM budget: double-buffered state/output tiles + f32/bf16
    # [tb, 64] temporaries + resident weights, with ~2x margin. ------------
    est = 4 * tb * (2 * S + 2 + 8 * H) + 4 * (S * H + H * H + 4 * H)
    vmem_limit = int(min(64 << 20, max(32 << 20, 2 * est)))

    cost = pl.CostEstimate(
        flops=2 * b_pad * (S * H + H * H + H),
        transcendentals=0,
        bytes_accessed=(B * S * 4                              # f32 state stream
                        + (S * H + H * H + H) * 2              # bf16 weights
                        + (2 * H + 1) * 4                      # f32 biases
                        + b_pad * 4),                          # f32 output
    )

    out = pl.pallas_call(
        critic_kernel,
        out_shape=jax.ShapeDtypeStruct((b_pad, 1), jnp.float32),
        grid=(grid_b,),
        in_specs=[
            pl.BlockSpec((tb, S), lambda i: (i, 0)),   # state tile (streamed)
            pl.BlockSpec((S, H), lambda i: (0, 0)),    # w1  (resident)
            pl.BlockSpec((1, H), lambda i: (0, 0)),    # b1  (resident)
            pl.BlockSpec((H, H), lambda i: (0, 0)),    # w2  (resident)
            pl.BlockSpec((1, H), lambda i: (0, 0)),    # b2  (resident)
            pl.BlockSpec((H, 1), lambda i: (0, 0)),    # w3  (resident)
            pl.BlockSpec((1, 1), lambda i: (0, 0)),    # b3  (resident)
        ],
        out_specs=pl.BlockSpec((tb, 1), lambda i: (i, 0)),
        compiler_params=pltpu.CompilerParams(
            dimension_semantics=("parallel",),
            vmem_limit_bytes=vmem_limit),
        cost_estimate=cost,
    )(state, w1_b, b1_f, w2_b, b2_f, w3_b, b3_f)

    return out[:B]


def init_params(key, state_dims, hidden=HIDDEN):
    """PyTorch nn.Linear-style init (uniform +-1/sqrt(fan_in)).

    Weights stored [in, out] (kernel computes x @ W + b == x @ W_pt.T + b_pt);
    biases stored [1, out] for 2-D broadcast.
    """
    k1, k2, k3, k4, k5, k6 = jax.random.split(key, 6)

    def lin(kw, kb, fan_in, fan_out):
        bound = 1.0 / jnp.sqrt(jnp.asarray(fan_in, jnp.float32))
        w = jax.random.uniform(kw, (fan_in, fan_out), jnp.float32, -bound, bound)
        b = jax.random.uniform(kb, (1, fan_out), jnp.float32, -bound, bound)
        return w, b

    w1, b1 = lin(k1, k2, state_dims, hidden)   # fc1
    w2, b2 = lin(k3, k4, hidden, hidden)       # fc2
    w3, b3 = lin(k5, k6, hidden, 1)            # value head
    return (w1, b1, w2, b2, w3, b3)


def critic_reference(state, params):
    """Pure-JAX reference mirroring the kernel's numerics
    (bf16 matmul inputs, f32 accumulation, f32 elementwise)."""
    w1, b1, w2, b2, w3, b3 = params
    xb = state.astype(jnp.bfloat16)
    h1 = jnp.dot(xb, w1.astype(jnp.bfloat16),
                 preferred_element_type=jnp.float32) + b1
    h1 = jnp.maximum(h1, 0.0)
    h2 = jnp.dot(h1.astype(jnp.bfloat16), w2.astype(jnp.bfloat16),
                 preferred_element_type=jnp.float32) + b2
    h2 = jnp.maximum(h2, 0.0)
    v = jnp.dot(h2.astype(jnp.bfloat16), w3.astype(jnp.bfloat16),
                preferred_element_type=jnp.float32) + b3.reshape(1, 1)
    return v


if __name__ == "__main__":
    key = jax.random.PRNGKey(0)
    k_params, k_state = jax.random.split(key)

    # batch deliberately not a multiple of the tile -> exercises both the
    # 2-step "parallel" grid and the ragged last block (no wrapper pad).
    batch = 50
    state_dims = 16

    params = init_params(k_params, state_dims)
    state = jax.random.normal(k_state, (batch, state_dims), jnp.float32)

    value = critic_forward(state, params)
    value = jax.block_until_ready(value)

    ref = critic_reference(state, params)
    assert value.shape == (batch, 1), value.shape
    assert jnp.allclose(value, ref, atol=2e-4, rtol=2e-4), (value, ref)

    print("KERNEL_OK")
</pallas_src>

<mosaic_0001>
module attributes {stable_mosaic.version = 11 : i64} {
  func.func @critic_kernel(%arg0: i32, %arg1: memref<32x16xf32, #tpu.memory_space<vmem>>, %arg2: memref<16x64xbf16, #tpu.memory_space<vmem>>, %arg3: memref<1x64xf32, #tpu.memory_space<vmem>>, %arg4: memref<64x64xbf16, #tpu.memory_space<vmem>>, %arg5: memref<1x64xf32, #tpu.memory_space<vmem>>, %arg6: memref<64x1xbf16, #tpu.memory_space<vmem>>, %arg7: memref<1x1xf32, #tpu.memory_space<vmem>>, %arg8: memref<32x1xf32, #tpu.memory_space<vmem>>) attributes {dimension_semantics = [#tpu.dimension_semantics<parallel>], iteration_bounds = array<i64: 2>, scalar_prefetch = 0 : i64, scratch_operands = 0 : i64, tpu.core_type = #tpu.core_type<tc>, window_params = [{transform_indices = @transform_0, window_bounds = array<i64: 32, 16>}, {pipeline_mode = #tpu.pipeline_mode<synchronous>, transform_indices = @transform_1, window_bounds = array<i64: 16, 64>}, {pipeline_mode = #tpu.pipeline_mode<synchronous>, transform_indices = @transform_2, window_bounds = array<i64: 1, 64>}, {pipeline_mode = #tpu.pipeline_mode<synchronous>, transform_indices = @transform_3, window_bounds = array<i64: 64, 64>}, {pipeline_mode = #tpu.pipeline_mode<synchronous>, transform_indices = @transform_4, window_bounds = array<i64: 1, 64>}, {pipeline_mode = #tpu.pipeline_mode<synchronous>, transform_indices = @transform_5, window_bounds = array<i64: 64, 1>}, {pipeline_mode = #tpu.pipeline_mode<synchronous>, transform_indices = @transform_6, window_bounds = array<i64: 1, 1>}, {transform_indices = @transform_7, window_bounds = array<i64: 32, 1>}]} {
    %c0 = arith.constant 0 : index
    %c0_0 = arith.constant 0 : index
    %0 = vector.load %arg1[%c0, %c0_0] : memref<32x16xf32, #tpu.memory_space<vmem>>, vector<32x16xf32>
    %1 = arith.truncf %0 : vector<32x16xf32> to vector<32x16xbf16>
    %c0_1 = arith.constant 0 : index
    %c0_2 = arith.constant 0 : index
    %2 = vector.load %arg2[%c0_1, %c0_2] : memref<16x64xbf16, #tpu.memory_space<vmem>>, vector<16x64xbf16>
    %cst = arith.constant dense<0.000000e+00> : vector<32x64xf32>
    %3 = tpu.matmul %1, %2, %cst {dimension_numbers = #tpu.dot_dimension_numbers<[1], [0], [0], [1], [0, 0, 1, 1], [], []>} : vector<32x16xbf16>, vector<16x64xbf16>, vector<32x64xf32> -> vector<32x64xf32>
    %c0_3 = arith.constant 0 : index
    %c0_4 = arith.constant 0 : index
    %4 = vector.load %arg3[%c0_3, %c0_4] : memref<1x64xf32, #tpu.memory_space<vmem>>, vector<1x64xf32>
    %5 = vector.broadcast %4 : vector<1x64xf32> to vector<32x64xf32>
    %6 = arith.addf %3, %5 : vector<32x64xf32>
    %cst_5 = arith.constant 0.000000e+00 : f32
    %7 = vector.broadcast %cst_5 : f32 to vector<32x64xf32>
    %8 = arith.maximumf %6, %7 : vector<32x64xf32>
    %9 = arith.truncf %8 : vector<32x64xf32> to vector<32x64xbf16>
    %c0_6 = arith.constant 0 : index
    %c0_7 = arith.constant 0 : index
    %10 = vector.load %arg4[%c0_6, %c0_7] : memref<64x64xbf16, #tpu.memory_space<vmem>>, vector<64x64xbf16>
    %cst_8 = arith.constant dense<0.000000e+00> : vector<32x64xf32>
    %11 = tpu.matmul %9, %10, %cst_8 {dimension_numbers = #tpu.dot_dimension_numbers<[1], [0], [0], [1], [0, 0, 1, 1], [], []>} : vector<32x64xbf16>, vector<64x64xbf16>, vector<32x64xf32> -> vector<32x64xf32>
    %c0_9 = arith.constant 0 : index
    %c0_10 = arith.constant 0 : index
    %12 = vector.load %arg5[%c0_9, %c0_10] : memref<1x64xf32, #tpu.memory_space<vmem>>, vector<1x64xf32>
    %13 = vector.broadcast %12 : vector<1x64xf32> to vector<32x64xf32>
    %14 = arith.addf %11, %13 : vector<32x64xf32>
    %cst_11 = arith.constant 0.000000e+00 : f32
    %15 = vector.broadcast %cst_11 : f32 to vector<32x64xf32>
    %16 = arith.maximumf %14, %15 : vector<32x64xf32>
    %17 = arith.truncf %16 : vector<32x64xf32> to vector<32x64xbf16>
    %c0_12 = arith.constant 0 : index
    %c0_13 = arith.constant 0 : index
    %18 = vector.load %arg6[%c0_12, %c0_13] : memref<64x1xbf16, #tpu.memory_space<vmem>>, vector<64x1xbf16>
    %cst_14 = arith.constant dense<0.000000e+00> : vector<32x1xf32>
    %19 = tpu.matmul %17, %18, %cst_14 {dimension_numbers = #tpu.dot_dimension_numbers<[1], [0], [0], [1], [0, 0, 1, 1], [], []>} : vector<32x64xbf16>, vector<64x1xbf16>, vector<32x1xf32> -> vector<32x1xf32>
    %c0_15 = arith.constant 0 : index
    %c0_16 = arith.constant 0 : index
    %20 = vector.load %arg7[%c0_15, %c0_16] : memref<1x1xf32, #tpu.memory_space<vmem>>, vector<1x1xf32>
    %21 = vector.broadcast %20 : vector<1x1xf32> to vector<32x1xf32>
    %22 = arith.addf %19, %21 : vector<32x1xf32>
    %c0_17 = arith.constant 0 : index
    %c0_18 = arith.constant 0 : index
    %23 = vector.load %arg8[%c0_17, %c0_18] : memref<32x1xf32, #tpu.memory_space<vmem>>, vector<32x1xf32>
    tpu.vector_store %arg8[%c0_17, %c0_18], %22 {strides = array<i32>} : memref<32x1xf32, #tpu.memory_space<vmem>>, vector<32x1xf32>,
    return
  }
  func.func @transform_0(%arg0: i32) -> (i32, i32) {
    %c0_i32 = arith.constant 0 : i32
    %c0_i32_0 = arith.constant 0 : i32
    return %arg0, %c0_i32 : i32, i32
  }
  func.func @transform_1(%arg0: i32) -> (i32, i32) {
    %c0_i32 = arith.constant 0 : i32
    %c0_i32_0 = arith.constant 0 : i32
    %c0_i32_1 = arith.constant 0 : i32
    return %c0_i32, %c0_i32_0 : i32, i32
  }
  func.func @transform_2(%arg0: i32) -> (i32, i32) {
    %c0_i32 = arith.constant 0 : i32
    %c0_i32_0 = arith.constant 0 : i32
    %c0_i32_1 = arith.constant 0 : i32
    return %c0_i32, %c0_i32_0 : i32, i32
  }
  func.func @transform_3(%arg0: i32) -> (i32, i32) {
    %c0_i32 = arith.constant 0 : i32
    %c0_i32_0 = arith.constant 0 : i32
    %c0_i32_1 = arith.constant 0 : i32
    return %c0_i32, %c0_i32_0 : i32, i32
  }
  func.func @transform_4(%arg0: i32) -> (i32, i32) {
    %c0_i32 = arith.constant 0 : i32
    %c0_i32_0 = arith.constant 0 : i32
    %c0_i32_1 = arith.constant 0 : i32
    return %c0_i32, %c0_i32_0 : i32, i32
  }
  func.func @transform_5(%arg0: i32) -> (i32, i32) {
    %c0_i32 = arith.constant 0 : i32
    %c0_i32_0 = arith.constant 0 : i32
    %c0_i32_1 = arith.constant 0 : i32
    return %c0_i32, %c0_i32_0 : i32, i32
  }
  func.func @transform_6(%arg0: i32) -> (i32, i32) {
    %c0_i32 = arith.constant 0 : i32
    %c0_i32_0 = arith.constant 0 : i32
    %c0_i32_1 = arith.constant 0 : i32
    return %c0_i32, %c0_i32_0 : i32, i32
  }
  func.func @transform_7(%arg0: i32) -> (i32, i32) {
    %c0_i32 = arith.constant 0 : i32
    %c0_i32_0 = arith.constant 0 : i32
    return %arg0, %c0_i32 : i32, i32
  }
}

</mosaic_0001>

<llo_original>
// kernel: tpu_custom_call.1
$region0: #{tpu_custom_call.1}
  #allocation0 [shape = 'u32[]', space=smem, size = 0x4, offset = 0x4, fixed_abs, tag = 'smem constant byte address 0x4 - core index']
  #allocation1 [shape = 'u32[144,128]{1,0:T(1,128)}', space=vmem, size = 0x12000, scoped, tag = 'internal scratch']
  #allocation2 [shape = 'f32[1,1]{1,0:T(1,128)S(1)}', space=vmem, size = 0x200, scoped, tag = 'scoped memory for tpu_custom_call.1']
  %s0 = inlined_call_operand.vmem [shape: f32[50,16], index: 0, kind: input, shape index: {}]
  %s1 = inlined_call_operand.vmem [shape: bf16[16,64], index: 1, kind: input, shape index: {}]
  %s2 = inlined_call_operand.vmem [shape: f32[1,64], index: 2, kind: input, shape index: {}]
  %s3 = inlined_call_operand.vmem [shape: bf16[64,64], index: 3, kind: input, shape index: {}]
  %s4 = inlined_call_operand.vmem [shape: f32[1,64], index: 4, kind: input, shape index: {}]
  %s5 = inlined_call_operand.vmem [shape: bf16[64,1], index: 5, kind: input, shape index: {}]
  %s6 = inlined_call_operand.<no memory space> [shape: f32[1,1], index: 6, kind: input, shape index: {}]
  %s7 = inlined_call_operand.vmem [shape: f32[64,1], index: 7, kind: output, shape index: {}]
  %s8 = sld [smem:[#allocation0]]
  $region61: #{tpu_custom_call.1} parent=0
    _
  %s10 = ssub.s32 1, %s8
  %s11 = scalar_select 0, %s10, %s8
  %v12 = vstv %s6
  %13 = vst [vmem:[#allocation2] sm:$0x1] %v12
  loop: start=0, step=1, limit=4
  $region2: #{tpu_custom_call.1} parent=0 // loop_pre_header
    _
  $region3: #{tpu_custom_call.1} parent=0 // loop_header
    %s15 = sphi 0, %s19
    %p16 = scmp.ge.s32.totalorder %s15, 4
    %s25 = sphi 0, %s27
    %s28 = sphi 0, %s25
    %s29 = sphi 0, %s28
    %s45 = sphi 0, %s29
    %s49 = sphi 0, %s49
    %s51 = sphi 0, %s49
    %s52 = sphi 0, %s51
    %s66 = sphi 0, %s52
    %s70 = sphi 0, %s70
    %s72 = sphi 0, %s70
    %s73 = sphi 0, %s72
    %s87 = sphi 0, %s73
    %s91 = sphi 0, %s91
    %s93 = sphi 0, %s91
    %s94 = sphi 0, %s93
    %s108 = sphi 0, %s94
    %s112 = sphi 0, %s112
    %s114 = sphi 0, %s112
    %s115 = sphi 0, %s114
    %s129 = sphi 0, %s115
    %s133 = sphi 0, %s133
    %s135 = sphi 0, %s133
    %s136 = sphi 0, %s135
    %s150 = sphi 0, %s136
    %s154 = sphi 0, %s154
    %s156 = sphi 0, %s154
    %s157 = sphi 0, %s156
    %s171 = sphi 0, %s157
    %s177 = sphi 0, %s179
    %s180 = sphi 0, %s177
    %s181 = sphi 0, %s180
    %s197 = sphi 0, %s181
  $region4: #{tpu_custom_call.1} parent=0 // loop_header_branch
    %18 = sbr.rel (%p16) target = $region8
  $region5: #{tpu_custom_call.1} parent=0 // loop_body
    %s20 = ssub.s32 %s15, 1
    %s21 = ssub.s32 %s15, 2
    %s22 = sadd.s32 %s15, 1
    %s23 = ssub.s32 %s15, %s22
    %p24 = scmp.eq.s32.totalorder %s23, 0
    %s26 = sadd.s32 %s25, 1
    %s27 = scalar_select %p24, %s25, %s26
    %p30 = pneg %p24
    %p31 = scmp.eq.s32.totalorder %s15, 1
    %p32 = por %p30, %p31
    %p33 = scmp.ne.s32.totalorder %s25, %s28
    %p34 = scmp.eq.s32.totalorder %s15, 0
    %p35 = por %p33, %p34
    %p36 = scmp.ne.s32.totalorder %s25, %s28
    %p37 = scmp.eq.s32.totalorder %s20, 1
    %p38 = por %p36, %p37
    %p39 = scmp.ne.s32.totalorder %s28, %s29
    %p40 = scmp.eq.s32.totalorder %s20, 0
    %p41 = por %p39, %p40
    %p42 = scmp.ne.s32.totalorder %s28, %s29
    %p43 = scmp.eq.s32.totalorder %s21, 1
    %p44 = por %p42, %p43
    %p46 = scmp.ne.s32.totalorder %s29, %s45
    %p47 = scmp.eq.s32.totalorder %s21, 0
    %p48 = por %p46, %p47
    %s50 = sadd.s32 %s49, 1
    %p53 = scmp.eq.s32.totalorder %s15, 1
    %p54 = scmp.ne.s32.totalorder %s49, %s51
    %p55 = scmp.eq.s32.totalorder %s15, 0
    %p56 = por %p54, %p55
    %p57 = scmp.ne.s32.totalorder %s49, %s51
    %p58 = scmp.eq.s32.totalorder %s20, 1
    %p59 = por %p57, %p58
    %p60 = scmp.ne.s32.totalorder %s51, %s52
    %p61 = scmp.eq.s32.totalorder %s20, 0
    %p62 = por %p60, %p61
    %p63 = scmp.ne.s32.totalorder %s51, %s52
    %p64 = scmp.eq.s32.totalorder %s21, 1
    %p65 = por %p63, %p64
    %p67 = scmp.ne.s32.totalorder %s52, %s66
    %p68 = scmp.eq.s32.totalorder %s21, 0
    %p69 = por %p67, %p68
    %s71 = sadd.s32 %s70, 1
    %p74 = scmp.eq.s32.totalorder %s15, 1
    %p75 = scmp.ne.s32.totalorder %s70, %s72
    %p76 = scmp.eq.s32.totalorder %s15, 0
    %p77 = por %p75, %p76
    %p78 = scmp.ne.s32.totalorder %s70, %s72
    %p79 = scmp.eq.s32.totalorder %s20, 1
    %p80 = por %p78, %p79
    %p81 = scmp.ne.s32.totalorder %s72, %s73
    %p82 = scmp.eq.s32.totalorder %s20, 0
    %p83 = por %p81, %p82
    %p84 = scmp.ne.s32.totalorder %s72, %s73
    %p85 = scmp.eq.s32.totalorder %s21, 1
    %p86 = por %p84, %p85
    %p88 = scmp.ne.s32.totalorder %s73, %s87
    %p89 = scmp.eq.s32.totalorder %s21, 0
    %p90 = por %p88, %p89
    %s92 = sadd.s32 %s91, 1
    %p95 = scmp.eq.s32.totalorder %s15, 1
    %p96 = scmp.ne.s32.totalorder %s91, %s93
    %p97 = scmp.eq.s32.totalorder %s15, 0
    %p98 = por %p96, %p97
    %p99 = scmp.ne.s32.totalorder %s91, %s93
    %p100 = scmp.eq.s32.totalorder %s20, 1
    %p101 = por %p99, %p100
    %p102 = scmp.ne.s32.totalorder %s93, %s94
    %p103 = scmp.eq.s32.totalorder %s20, 0
    %p104 = por %p102, %p103
    %p105 = scmp.ne.s32.totalorder %s93, %s94
    %p106 = scmp.eq.s32.totalorder %s21, 1
    %p107 = por %p105, %p106
    %p109 = scmp.ne.s32.totalorder %s94, %s108
    %p110 = scmp.eq.s32.totalorder %s21, 0
    %p111 = por %p109, %p110
    %s113 = sadd.s32 %s112, 1
    %p116 = scmp.eq.s32.totalorder %s15, 1
    %p117 = scmp.ne.s32.totalorder %s112, %s114
    %p118 = scmp.eq.s32.totalorder %s15, 0
    %p119 = por %p117, %p118
    %p120 = scmp.ne.s32.totalorder %s112, %s114
    %p121 = scmp.eq.s32.totalorder %s20, 1
    %p122 = por %p120, %p121
    %p123 = scmp.ne.s32.totalorder %s114, %s115
    %p124 = scmp.eq.s32.totalorder %s20, 0
    %p125 = por %p123, %p124
    %p126 = scmp.ne.s32.totalorder %s114, %s115
    %p127 = scmp.eq.s32.totalorder %s21, 1
    %p128 = por %p126, %p127
    %p130 = scmp.ne.s32.totalorder %s115, %s129
    %p131 = scmp.eq.s32.totalorder %s21, 0
    %p132 = por %p130, %p131
    %s134 = sadd.s32 %s133, 1
    %p137 = scmp.eq.s32.totalorder %s15, 1
    %p138 = scmp.ne.s32.totalorder %s133, %s135
    %p139 = scmp.eq.s32.totalorder %s15, 0
    %p140 = por %p138, %p139
    %p141 = scmp.ne.s32.totalorder %s133, %s135
    %p142 = scmp.eq.s32.totalorder %s20, 1
    %p143 = por %p141, %p142
    %p144 = scmp.ne.s32.totalorder %s135, %s136
    %p145 = scmp.eq.s32.totalorder %s20, 0
    %p146 = por %p144, %p145
    %p147 = scmp.ne.s32.totalorder %s135, %s136
    %p148 = scmp.eq.s32.totalorder %s21, 1
    %p149 = por %p147, %p148
    %p151 = scmp.ne.s32.totalorder %s136, %s150
    %p152 = scmp.eq.s32.totalorder %s21, 0
    %p153 = por %p151, %p152
    %s155 = sadd.s32 %s154, 1
    %p158 = scmp.eq.s32.totalorder %s15, 1
    %p159 = scmp.ne.s32.totalorder %s154, %s156
    %p160 = scmp.eq.s32.totalorder %s15, 0
    %p161 = por %p159, %p160
    %p162 = scmp.ne.s32.totalorder %s154, %s156
    %p163 = scmp.eq.s32.totalorder %s20, 1
    %p164 = por %p162, %p163
    %p165 = scmp.ne.s32.totalorder %s156, %s157
    %p166 = scmp.eq.s32.totalorder %s20, 0
    %p167 = por %p165, %p166
    %p168 = scmp.ne.s32.totalorder %s156, %s157
    %p169 = scmp.eq.s32.totalorder %s21, 1
    %p170 = por %p168, %p169
    %p172 = scmp.ne.s32.totalorder %s157, %s171
    %p173 = scmp.eq.s32.totalorder %s21, 0
    %p174 = por %p172, %p173
    %s175 = ssub.s32 %s15, %s22
    %p176 = scmp.eq.s32.totalorder %s175, 0
    %s178 = sadd.s32 %s177, 1
    %s179 = scalar_select %p176, %s177, %s178
    %p182 = pneg %p176
    %p183 = scmp.eq.s32.totalorder %s15, 1
    %p184 = por %p182, %p183
    %p185 = scmp.ne.s32.totalorder %s177, %s180
    %p186 = scmp.eq.s32.totalorder %s15, 0
    %p187 = por %p185, %p186
    %p188 = scmp.ne.s32.totalorder %s177, %s180
    %p189 = scmp.eq.s32.totalorder %s20, 1
    %p190 = por %p188, %p189
    %p191 = scmp.ne.s32.totalorder %s180, %s181
    %p192 = scmp.eq.s32.totalorder %s20, 0
    %p193 = por %p191, %p192
    %p194 = scmp.ne.s32.totalorder %s180, %s181
    %p195 = scmp.eq.s32.totalorder %s21, 1
    %p196 = por %p194, %p195
    %p198 = scmp.ne.s32.totalorder %s181, %s197
    %p199 = scmp.eq.s32.totalorder %s21, 0
    %p200 = por %p198, %p199
    %p201 = scmp.le.s32.totalorder 1, %s15
    %p202 = scmp.lt.s32.totalorder %s15, 3
    %p203 = pnand %p201, %p202
    %p204 = pneg %p203
    // Predicated region
    $region9: #{tpu_custom_call.1} parent=5 // pred_check
      _
    $region10: #{tpu_custom_call.1} parent=5 // pred_check_branch
      %206 = sbr.rel (%p203) target = $region12
    $region11: #{tpu_custom_call.1} parent=5 // pred_region
      %s207 = ssub.s32 %s15, 1
      // Predicated region
      $region13: #{tpu_custom_call.1} parent=11 // pred_check
        %p208 = pneg %p62
      $region14: #{tpu_custom_call.1} parent=11 // pred_check_branch
        %210 = sbr.rel (%p208) target = $region16
      $region15: #{tpu_custom_call.1} parent=11 // pred_region
        _
      $region16: #{tpu_custom_call.1} parent=11 // pred_fallthru
        _
      // Predicated region
      $region17: #{tpu_custom_call.1} parent=11 // pred_check
        %p211 = pneg %p83
      $region18: #{tpu_custom_call.1} parent=11 // pred_check_branch
        %213 = sbr.rel (%p211) target = $region20
      $region19: #{tpu_custom_call.1} parent=11 // pred_region
        _
      $region20: #{tpu_custom_call.1} parent=11 // pred_fallthru
        _
      // Predicated region
      $region21: #{tpu_custom_call.1} parent=11 // pred_check
        %p214 = pneg %p104
      $region22: #{tpu_custom_call.1} parent=11 // pred_check_branch
        %216 = sbr.rel (%p214) target = $region24
      $region23: #{tpu_custom_call.1} parent=11 // pred_region
        _
      $region24: #{tpu_custom_call.1} parent=11 // pred_fallthru
        _
      // Predicated region
      $region25: #{tpu_custom_call.1} parent=11 // pred_check
        %p217 = pneg %p125
      $region26: #{tpu_custom_call.1} parent=11 // pred_check_branch
        %219 = sbr.rel (%p217) target = $region28
      $region27: #{tpu_custom_call.1} parent=11 // pred_region
        _
      $region28: #{tpu_custom_call.1} parent=11 // pred_fallthru
        _
      // Predicated region
      $region29: #{tpu_custom_call.1} parent=11 // pred_check
        %p220 = pneg %p146
      $region30: #{tpu_custom_call.1} parent=11 // pred_check_branch
        %222 = sbr.rel (%p220) target = $region32
      $region31: #{tpu_custom_call.1} parent=11 // pred_region
        _
      $region32: #{tpu_custom_call.1} parent=11 // pred_fallthru
        _
      // Predicated region
      $region33: #{tpu_custom_call.1} parent=11 // pred_check
        %p223 = pneg %p167
      $region34: #{tpu_custom_call.1} parent=11 // pred_check_branch
        %225 = sbr.rel (%p223) target = $region36
      $region35: #{tpu_custom_call.1} parent=11 // pred_region
        _
      $region36: #{tpu_custom_call.1} parent=11 // pred_fallthru
        _
    $region12: #{tpu_custom_call.1} parent=5 // pred_fallthru
      _
    %p226 = scmp.lt.s32.totalorder %s15, 2
    // Predicated region
    $region37: #{tpu_custom_call.1} parent=5 // pred_check
      %p227 = pneg %p226
    $region38: #{tpu_custom_call.1} parent=5 // pred_check_branch
      %229 = sbr.rel (%p227) target = $region40
    $region39: #{tpu_custom_call.1} parent=5 // pred_region
      // Predicated region
      $region41: #{tpu_custom_call.1} parent=39 // pred_check
        %p230 = pneg %p35
      $region42: #{tpu_custom_call.1} parent=39 // pred_check_branch
        %232 = sbr.rel (%p230) target = $region44
      $region43: #{tpu_custom_call.1} parent=39 // pred_region
        %s233 = smul.u32 4, %s15
        %s234 = ssub.s32 7, %s233
        %p235 = scmp.lt.s32.totalorder %s234, 4
        %s236 = scalar_select %p235, %s234, 4
        %s237 = smul.u32 128, %s236
        %p238 = scmp.lt.s32.totalorder %s233, 6
        %s239 = scalar_select %p238, %s233, 6
        %s240 = smul.addr %s239, 8
        %s241 = scalar_lea.vmem %s0, %s240
        %s242 = smul.u32 4, %s15
        %s243 = ssub.s32 7, %s242
        %p244 = scmp.lt.s32.totalorder %s243, 4
        %s245 = scalar_select %p244, %s243, 4
        %s246 = smul.u32 128, %s245
      $region44: #{tpu_custom_call.1} parent=39 // pred_fallthru
        _
    $region40: #{tpu_custom_call.1} parent=5 // pred_fallthru
      _
    %p247 = scmp.le.s32.totalorder 1, %s15
    %p248 = scmp.lt.s32.totalorder %s15, 3
    %p249 = pnand %p247, %p248
    %p250 = pneg %p249
    // Predicated region
    $region45: #{tpu_custom_call.1} parent=5 // pred_check
      _
    $region46: #{tpu_custom_call.1} parent=5 // pred_check_branch
      %252 = sbr.rel (%p249) target = $region48
    $region47: #{tpu_custom_call.1} parent=5 // pred_region
      %s253 = ssub.s32 %s15, 1
      %s254 = smul.u32 4, %s20
      %s255 = ssub.s32 7, %s254
      %p256 = scmp.lt.s32.totalorder %s255, 4
      %s257 = scalar_select %p256, %s255, 4
      %s258 = smul.u32 128, %s257
      %p259 = scmp.lt.s32.totalorder %s254, 6
      %s260 = scalar_select %p259, %s254, 6
      %s261 = smul.addr %s260, 8
      %s262 = scalar_lea.vmem %s0, %s261
      %p263 = pneg %p41
      %p264 = pneg %p38
      %p265 = pneg %p62
      %p266 = pneg %p59
      %p267 = pneg %p83
      %p268 = pneg %p80
      %p269 = pneg %p104
      %p270 = pneg %p101
      %p271 = pneg %p125
      %p272 = pneg %p122
      %p273 = pneg %p146
      %p274 = pneg %p143
      %p275 = pneg %p167
      %p276 = pneg %p164
      %p277 = pneg %p193
      %p278 = pneg %p190
      %s279 = smul.u32 4, %s20
      %p280 = scmp.lt.s32.totalorder %s279, 7
      %s281 = scalar_select %p280, %s279, 7
      %s282 = smul.addr %s281, 8
      %s283 = scalar_lea.vmem %s7, %s282
      %s284 = smul.u32 4, %s20
      %s285 = ssub.s32 7, %s284
      %p286 = scmp.lt.s32.totalorder %s285, 4
      %s287 = scalar_select %p286, %s285, 4
      %s288 = smul.u32 128, %s287
      %p289 = scmp.lt.s32.totalorder %s284, 6
      %s290 = scalar_select %p289, %s284, 6
      %s291 = smul.addr %s290, 8
      %s292 = scalar_lea.vmem %s0, %s291
      %s293 = smul.u32 4, %s20
      %s294 = ssub.s32 7, %s293
      %p295 = scmp.lt.s32.totalorder %s294, 4
      %s296 = scalar_select %p295, %s294, 4
      %s297 = smul.u32 128, %s296
      %s298 = smul.u32 4, %s20
      %p299 = scmp.lt.s32.totalorder %s298, 7
      %s300 = scalar_select %p299, %s298, 7
      %s301 = smul.addr %s300, 8
      %s302 = scalar_lea.vmem %s7, %s301
      %s303 = smul.u32 4, %s20
      %v305 = vld [vmem:[%s292] sm:$0xff]
      %v306 = vld [vmem:[%s292 + $0x8] sm:$0xff]
      %v307 = vld [vmem:[%s292 + $0x10] sm:$0xff]
      %v308 = vld [vmem:[%s292 + $0x18] sm:$0xff]
      %v309 = vpack.c.bf16 %v306, %v305
      %v310 = vpack.c.bf16 %v308, %v307
      %v311 = vld [vmem:[%s1] sm:$0xf]
      %v312 = vld [vmem:[%s1 + $0x4] sm:$0xf]
      %v313 = vld [vmem:[%s2] sm:$0x1]
      %v315 = vlaneseq
      %v316 = vshrl.u32 %v315, 7
      %v317 = vsub.s32 0, %v316
      %v318 = vrot.slane %v313, %v317
      %v322 = vunpack.c.l.b16 %v311
      %v323 = vunpack.c.l.b16 %v312
      %v324 = vpack.c.b16 %v323, %v322
      %vm326 = vcmask 130048
      %v328 = vsel %vm326, %v309, 0
      %v331 = vsel %vm326, %v310, 0
      %333 = vmatprep.subr.bf16.mxu0 0
      %334 = vmatpush1.bf16.msra.mxu0 %v324
      %335 = vmatprep.subr.bf16.mxu0 0
      %336 = vmatpush1.bf16.msra.mxu0 0
      %337 = vmatprep.subr.bf16.mxu0 0
      %338 = vmatpush1.bf16.msra.mxu0 0
      %339 = vmatprep.subr.bf16.mxu0 0
      %340 = vmatpush1.bf16.msra.mxu0 0
      %341 = vmatprep.subr.bf16.mxu0 0
      %342 = vmatpush1.bf16.msra.mxu0 0
      %343 = vmatprep.subr.bf16.mxu0 0
      %344 = vmatpush1.bf16.msra.mxu0 0
      %345 = vmatprep.subr.bf16.mxu0 0
      %346 = vmatpush1.bf16.msra.mxu0 0
      %347 = vmatprep.subr.bf16.mxu0 0
      %348 = vmatpush1.bf16.msra.mxu0 0
      %349 = vmatprep.subr.bf16.mxu0 0
      %350 = vmatpush1.bf16.msra.mxu0 0
      %351 = vmatprep.subr.bf16.mxu0 0
      %352 = vmatpush1.bf16.msra.mxu0 0
      %353 = vmatprep.subr.bf16.mxu0 0
      %354 = vmatpush1.bf16.msra.mxu0 0
      %355 = vmatprep.subr.bf16.mxu0 0
      %356 = vmatpush1.bf16.msra.mxu0 0
      %357 = vmatprep.subr.bf16.mxu0 0
      %358 = vmatpush1.bf16.msra.mxu0 0
      %359 = vmatprep.subr.bf16.mxu0 0
      %360 = vmatpush1.bf16.msra.mxu0 0
      %361 = vmatprep.subr.bf16.mxu0 0
      %362 = vmatpush1.bf16.msra.mxu0 0
      %363 = vmatprep.subr.bf16.mxu0 0
      %364 = vmatpush1.bf16.msra.mxu0 0
      %365 = vmatprep.mubr.bf16.mxu0 0
      %366 = vmatmul.mubr.bf16.gmra.mrb[0].mxu0 %v328
      %v367 = vpop.f32.mrb[0].mxu0
      %v368 = vadd.f32 %v318, %v367
      %v369 = vpop.f32.mrb[0].mxu0
      %v370 = vpop.f32.mrb[0].mxu0
      %v371 = vadd.f32 %v318, %v370
      %v372 = vpop.f32.mrb[0].mxu0
      %373 = vmatprep.mubr.bf16.mxu0 0
      %374 = vmatmul.mubr.bf16.gmra.mrb[0].mxu0 %v331
      %v375 = vpop.f32.mrb[0].mxu0
      %v376 = vadd.f32 %v318, %v375
      %v377 = vpop.f32.mrb[0].mxu0
      %v378 = vpop.f32.mrb[0].mxu0
      %v379 = vadd.f32 %v318, %v378
      %v380 = vpop.f32.mrb[0].mxu0
      %381 = vdwg.mxu0
      %v382 = vmax.f32 %v368, 0.0
      %v383 = vmax.f32 %v371, 0.0
      %v384 = vmax.f32 %v376, 0.0
      %v385 = vmax.f32 %v379, 0.0
      %v386 = vpack.c.bf16 %v383, %v382
      %v387 = vpack.c.bf16 %v385, %v384
      %v388 = vld [vmem:[%s3] sm:$0xf]
      %v389 = vld [vmem:[%s3 + $0x4] sm:$0xf]
      %v390 = vld [vmem:[%s3 + $0x8] sm:$0xf]
      %v391 = vld [vmem:[%s3 + $0xc] sm:$0xf]
      %v392 = vld [vmem:[%s3 + $0x10] sm:$0xf]
      %v393 = vld [vmem:[%s3 + $0x14] sm:$0xf]
      %v394 = vld [vmem:[%s3 + $0x18] sm:$0xf]
      %v395 = vld [vmem:[%s3 + $0x1c] sm:$0xf]
      %v396 = vld [vmem:[%s4] sm:$0x1]
      %v398 = vlaneseq
      %v399 = vshrl.u32 %v398, 7
      %v400 = vsub.s32 0, %v399
      %v401 = vrot.slane %v396, %v400
      %v411 = vunpack.c.l.b16 %v388
      %v412 = vunpack.c.l.b16 %v389
      %v413 = vunpack.c.l.b16 %v390
      %v414 = vunpack.c.l.b16 %v391
      %v415 = vunpack.c.l.b16 %v392
      %v416 = vunpack.c.l.b16 %v393
      %v417 = vunpack.c.l.b16 %v394
      %v418 = vunpack.c.l.b16 %v395
      %v419 = vpack.c.b16 %v412, %v411
      %v420 = vpack.c.b16 %v414, %v413
      %v421 = vpack.c.b16 %v416, %v415
      %v422 = vpack.c.b16 %v418, %v417
      %vm427 = vcmask 523264
      %v429 = vsel %vm427, %v386, 0
      %v432 = vsel %vm427, %v387, 0
      %434 = vmatprep.subr.bf16.mxu0 0
      %435 = vmatpush1.bf16.msra.mxu0 %v419
      %436 = vmatprep.subr.bf16.mxu0 0
      %437 = vmatpush1.bf16.msra.mxu0 %v420
      %438 = vmatprep.subr.bf16.mxu0 0
      %439 = vmatpush1.bf16.msra.mxu0 %v421
      %440 = vmatprep.subr.bf16.mxu0 0
      %441 = vmatpush1.bf16.msra.mxu0 %v422
      %442 = vmatprep.subr.bf16.mxu0 0
      %443 = vmatpush1.bf16.msra.mxu0 0
      %444 = vmatprep.subr.bf16.mxu0 0
      %445 = vmatpush1.bf16.msra.mxu0 0
      %446 = vmatprep.subr.bf16.mxu0 0
      %447 = vmatpush1.bf16.msra.mxu0 0
      %448 = vmatprep.subr.bf16.mxu0 0
      %449 = vmatpush1.bf16.msra.mxu0 0
      %450 = vmatprep.subr.bf16.mxu0 0
      %451 = vmatpush1.bf16.msra.mxu0 0
      %452 = vmatprep.subr.bf16.mxu0 0
      %453 = vmatpush1.bf16.msra.mxu0 0
      %454 = vmatprep.subr.bf16.mxu0 0
      %455 = vmatpush1.bf16.msra.mxu0 0
      %456 = vmatprep.subr.bf16.mxu0 0
      %457 = vmatpush1.bf16.msra.mxu0 0
      %458 = vmatprep.subr.bf16.mxu0 0
      %459 = vmatpush1.bf16.msra.mxu0 0
      %460 = vmatprep.subr.bf16.mxu0 0
      %461 = vmatpush1.bf16.msra.mxu0 0
      %462 = vmatprep.subr.bf16.mxu0 0
      %463 = vmatpush1.bf16.msra.mxu0 0
      %464 = vmatprep.subr.bf16.mxu0 0
      %465 = vmatpush1.bf16.msra.mxu0 0
      %466 = vmatprep.mubr.bf16.mxu0 0
      %467 = vmatmul.mubr.bf16.gmra.mrb[0].mxu0 %v429
      %v468 = vpop.f32.mrb[0].mxu0
      %v469 = vadd.f32 %v401, %v468
      %v470 = vpop.f32.mrb[0].mxu0
      %v471 = vpop.f32.mrb[0].mxu0
      %v472 = vadd.f32 %v401, %v471
      %v473 = vpop.f32.mrb[0].mxu0
      %474 = vmatprep.mubr.bf16.mxu0 0
      %475 = vmatmul.mubr.bf16.gmra.mrb[0].mxu0 %v432
      %v476 = vpop.f32.mrb[0].mxu0
      %v477 = vadd.f32 %v401, %v476
      %v478 = vpop.f32.mrb[0].mxu0
      %v479 = vpop.f32.mrb[0].mxu0
      %v480 = vadd.f32 %v401, %v479
      %v481 = vpop.f32.mrb[0].mxu0
      %482 = vdwg.mxu0
      %v483 = vmax.f32 %v469, 0.0
      %v484 = vmax.f32 %v472, 0.0
      %v485 = vmax.f32 %v477, 0.0
      %v486 = vmax.f32 %v480, 0.0
      %v487 = vpack.c.bf16 %v484, %v483
      %v488 = vpack.c.bf16 %v486, %v485
      %v489 = vld [vmem:[%s5] sm:$0xf]
      %v490 = vld [vmem:[%s5 + $0x4] sm:$0xf]
      %v491 = vld [vmem:[%s5 + $0x8] sm:$0xf]
      %v492 = vld [vmem:[%s5 + $0xc] sm:$0xf]
      %v493 = vld [vmem:[%s5 + $0x10] sm:$0xf]
      %v494 = vld [vmem:[%s5 + $0x14] sm:$0xf]
      %v495 = vld [vmem:[%s5 + $0x18] sm:$0xf]
      %v496 = vld [vmem:[%s5 + $0x1c] sm:$0xf]
      %v497 = vld [vmem:[#allocation2] sm:$0x1]
      %v499 = vlaneseq
      %v500 = vshrl.u32 %v499, 7
      %v501 = vsub.s32 0, %v500
      %v502 = vrot.slane %v497, %v501
      %v512 = vunpack.c.l.b16 %v489
      %v513 = vunpack.c.l.b16 %v490
      %v514 = vunpack.c.l.b16 %v491
      %v515 = vunpack.c.l.b16 %v492
      %v516 = vunpack.c.l.b16 %v493
      %v517 = vunpack.c.l.b16 %v494
      %v518 = vunpack.c.l.b16 %v495
      %v519 = vunpack.c.l.b16 %v496
      %v520 = vpack.c.b16 %v513, %v512
      %v521 = vpack.c.b16 %v515, %v514
      %v522 = vpack.c.b16 %v517, %v516
      %v523 = vpack.c.b16 %v519, %v518
      %v529 = vsel %vm427, %v487, 0
      %v532 = vsel %vm427, %v488, 0
      %534 = vmatprep.subr.bf16.mxu0 0
      %535 = vmatpush1.bf16.msra.mxu0 %v520
      %536 = vmatprep.subr.bf16.mxu0 0
      %537 = vmatpush1.bf16.msra.mxu0 %v521
      %538 = vmatprep.subr.bf16.mxu0 0
      %539 = vmatpush1.bf16.msra.mxu0 %v522
      %540 = vmatprep.subr.bf16.mxu0 0
      %541 = vmatpush1.bf16.msra.mxu0 %v523
      %542 = vmatprep.subr.bf16.mxu0 0
      %543 = vmatpush1.bf16.msra.mxu0 0
      %544 = vmatprep.subr.bf16.mxu0 0
      %545 = vmatpush1.bf16.msra.mxu0 0
      %546 = vmatprep.subr.bf16.mxu0 0
      %547 = vmatpush1.bf16.msra.mxu0 0
      %548 = vmatprep.subr.bf16.mxu0 0
      %549 = vmatpush1.bf16.msra.mxu0 0
      %550 = vmatprep.subr.bf16.mxu0 0
      %551 = vmatpush1.bf16.msra.mxu0 0
      %552 = vmatprep.subr.bf16.mxu0 0
      %553 = vmatpush1.bf16.msra.mxu0 0
      %554 = vmatprep.subr.bf16.mxu0 0
      %555 = vmatpush1.bf16.msra.mxu0 0
      %556 = vmatprep.subr.bf16.mxu0 0
      %557 = vmatpush1.bf16.msra.mxu0 0
      %558 = vmatprep.subr.bf16.mxu0 0
      %559 = vmatpush1.bf16.msra.mxu0 0
      %560 = vmatprep.subr.bf16.mxu0 0
      %561 = vmatpush1.bf16.msra.mxu0 0
      %562 = vmatprep.subr.bf16.mxu0 0
      %563 = vmatpush1.bf16.msra.mxu0 0
      %564 = vmatprep.subr.bf16.mxu0 0
      %565 = vmatpush1.bf16.msra.mxu0 0
      %566 = vmatprep.mubr.bf16.mxu0 0
      %567 = vmatmul.mubr.bf16.gmra.mrb[0].mxu0 %v529
      %v568 = vpop.f32.mrb[0].mxu0
      %v569 = vadd.f32 %v502, %v568
      %v570 = vpop.f32.mrb[0].mxu0
      %v571 = vpop.f32.mrb[0].mxu0
      %v572 = vadd.f32 %v502, %v571
      %v573 = vpop.f32.mrb[0].mxu0
      %574 = vmatprep.mubr.bf16.mxu0 0
      %575 = vmatmul.mubr.bf16.gmra.mrb[0].mxu0 %v532
      %v576 = vpop.f32.mrb[0].mxu0
      %v577 = vadd.f32 %v502, %v576
      %v578 = vpop.f32.mrb[0].mxu0
      %v579 = vpop.f32.mrb[0].mxu0
      %v580 = vadd.f32 %v502, %v579
      %v581 = vpop.f32.mrb[0].mxu0
      %582 = vdwg.mxu0
      %vm583 = vcmask 7168
      %584 = vst.msk [vmem:[%s302] sm:$0xff] %vm583, %v569
      %585 = vst.msk [vmem:[%s302 + $0x8] sm:$0xff] %vm583, %v572
      %586 = vst.msk [vmem:[%s302 + $0x10] sm:$0xff] %vm583, %v577
      %587 = vst.msk [vmem:[%s302 + $0x18] sm:$0xff] %vm583, %v580
      %s588 = smul.u32 4, %s20
      %p589 = scmp.lt.s32.totalorder %s588, 7
      %s590 = scalar_select %p589, %s588, 7
      %s591 = smul.addr %s590, 8
      %s592 = scalar_lea.vmem %s7, %s591
      // Predicated region
      $region49: #{tpu_custom_call.1} parent=47 // pred_check
        %p593 = pneg %p190
      $region50: #{tpu_custom_call.1} parent=47 // pred_check_branch
        %595 = sbr.rel (%p593) target = $region52
      $region51: #{tpu_custom_call.1} parent=47 // pred_region
        %s596 = smul.u32 4, %s20
      $region52: #{tpu_custom_call.1} parent=47 // pred_fallthru
        _
    $region48: #{tpu_custom_call.1} parent=5 // pred_fallthru
      _
    %p597 = scmp.le.s32.totalorder 2, %s15
    // Predicated region
    $region53: #{tpu_custom_call.1} parent=5 // pred_check
      %p598 = pneg %p597
    $region54: #{tpu_custom_call.1} parent=5 // pred_check_branch
      %600 = sbr.rel (%p598) target = $region56
    $region55: #{tpu_custom_call.1} parent=5 // pred_region
      %s601 = ssub.s32 %s15, 2
      // Predicated region
      $region57: #{tpu_custom_call.1} parent=55 // pred_check
        %p602 = pneg %p196
      $region58: #{tpu_custom_call.1} parent=55 // pred_check_branch
        %604 = sbr.rel (%p602) target = $region60
      $region59: #{tpu_custom_call.1} parent=55 // pred_region
        %s605 = smul.u32 4, %s21
        %p606 = scmp.lt.s32.totalorder %s605, 7
        %s607 = scalar_select %p606, %s605, 7
        %s608 = smul.addr %s607, 8
        %s609 = scalar_lea.vmem %s7, %s608
      $region60: #{tpu_custom_call.1} parent=55 // pred_fallthru
        _
    $region56: #{tpu_custom_call.1} parent=5 // pred_fallthru
      _
  $region6: #{tpu_custom_call.1} parent=0 // loop_footer
    %s19 = sadd.s32 1, %s15
  $region7: #{tpu_custom_call.1} parent=0 // loop_footer_branch
    %14 = sbr.rel target = $region3
  $region8: #{tpu_custom_call.1} parent=0 // loop_exit
    _

</llo_original>
